<compile_context>
chip_gen: v7x
topology: tpu7x:2x2x1
jax: 0.10.0
libtpu: 0.0.40
codegen_flags: <defaults>
</compile_context>

<pallas_src>
import functools

import jax
import jax.numpy as jnp
from jax.experimental import pallas as pl
from jax.experimental.pallas import tpu as pltpu


def _dncm_kernel(x_ref, mt_ref, o_ref):
    # x_ref : (1, 3, tile_hw)  channel-first pixels for this (batch, tile)
    # mt_ref: (1, 3, 3)        M_b^T  where  M_b = P @ T_b @ Q
    # o_ref : (1, 3, tile_hw)
    x = x_ref[0]      # (3, tile_hw)
    mt = mt_ref[0]    # (3, 3)

    # out[c, n] = sum_j mt[c, j] * x[j, n]   (VPU broadcast multiply-adds)
    acc = mt[:, 0:1] * x[0:1, :]
    acc = acc + mt[:, 1:2] * x[1:2, :]
    acc = acc + mt[:, 2:3] * x[2:3, :]

    o_ref[0] = acc.astype(o_ref.dtype)


def _choose_tile_hw(HW, bs, cap=32768):
    """Largest 128-multiple divisor of HW up to `cap` (falls back to HW)."""
    if HW <= cap or HW % 128 != 0:
        return HW
    cands = [t for t in range(128, min(HW, cap) + 1, 128) if HW % t == 0]
    if not cands:
        return HW
    # Keep at least a couple of spatial steps when batch is tiny so both
    # v7x TensorCores get work and the pipeline has steps to overlap.
    min_spatial_steps = 2 if bs < 2 else 1
    good = [t for t in cands if HW // t >= min_spatial_steps]
    return max(good) if good else max(cands)


@functools.partial(jax.jit, static_argnames=("tile_hw",))
def dncm_forward(I, T, P, Q, *, tile_hw=None):
    """DNCM forward.

    I : (bs, 3, H, W)  float32 (NCHW, like the PyTorch module)
    T : (bs, k*k)      float32 (per-image color transform, flattened)
    P : (3, k)         float32
    Q : (k, 3)         float32
    returns (bs, 3, H, W) float32
    """
    bs, C, H, W = I.shape
    assert C == 3
    k = P.shape[1]
    HW = H * W

    if tile_hw is None:
        tile_hw = _choose_tile_hw(HW, bs)
    assert HW % tile_hw == 0, "H*W must be a multiple of tile_hw"

    # Fold the per-batch chain into a single 3x3 matrix (tiny XLA op):
    #   M_b = P @ T_b @ Q            (3, 3)
    #   out_cf = M_b^T @ x_cf        (channel-first)
    M = jnp.einsum("ik,bkl,lj->bij", P, T.reshape(bs, k, k), Q)   # (bs, 3, 3)
    Mt = jnp.transpose(M, (0, 2, 1)).astype(jnp.float32)          # (bs, 3, 3)

    x = I.reshape(bs, C, HW)   # (bs, 3, HW) -- channel-first, spatial on lanes

    grid = (bs, HW // tile_hw)

    out_flat = pl.pallas_call(
        _dncm_kernel,
        out_shape=jax.ShapeDtypeStruct((bs, C, HW), I.dtype),
        grid_spec=pltpu.PrefetchScalarGridSpec(
            num_scalar_prefetch=0,
            grid=grid,
            in_specs=[
                pl.BlockSpec((1, C, tile_hw), lambda b, j: (b, 0, j)),
                pl.BlockSpec((1, C, C), lambda b, j: (b, 0, 0)),
            ],
            out_specs=pl.BlockSpec((1, C, tile_hw), lambda b, j: (b, 0, j)),
        ),
        compiler_params=pltpu.CompilerParams(
            dimension_semantics=("parallel", "parallel"),
        ),
        cost_estimate=pl.CostEstimate(
            flops=18 * bs * HW,
            transcendentals=0,
            bytes_accessed=2 * bs * C * HW * 4 + bs * C * C * 4,
        ),
    )(x, Mt)

    return out_flat.reshape(bs, C, H, W)


def _reference(I, T, P, Q):
    bs, C, H, W = I.shape
    k = P.shape[1]
    x = I.reshape(bs, C, H * W).transpose(0, 2, 1)               # (bs, HW, 3)
    out = x @ P                                                  # (bs, HW, k)
    out = jnp.einsum("bnk,bkj->bnj", out, T.reshape(bs, k, k))   # (bs, HW, k)
    out = out @ Q                                                # (bs, HW, 3)
    return out.reshape(bs, H, W, C).transpose(0, 3, 1, 2)        # (bs, 3, H, W)


if __name__ == "__main__":
    bs, C, H, W = 2, 3, 16, 16
    k = 16

    key = jax.random.PRNGKey(0)
    k_i, k_t, k_p, k_q = jax.random.split(key, 4)

    I = jax.random.normal(k_i, (bs, C, H, W), dtype=jnp.float32)
    T = jax.random.normal(k_t, (bs, k * k), dtype=jnp.float32)

    # kaiming_normal_ (fan_in, gain=sqrt(2)): std = sqrt(2 / fan_in)
    P = jax.random.normal(k_p, (C, k), dtype=jnp.float32) * jnp.sqrt(2.0 / k)
    Q = jax.random.normal(k_q, (k, C), dtype=jnp.float32) * jnp.sqrt(2.0 / C)

    out = dncm_forward(I, T, P, Q)
    out = jax.block_until_ready(out)

    ref = _reference(I, T, P, Q)
    assert out.shape == (bs, C, H, W)
    # Folding P@T@Q outside the kernel changes f.p. associativity slightly.
    assert jnp.allclose(out, ref, atol=2e-3, rtol=2e-4), "mismatch vs reference"

    print("KERNEL_OK")
</pallas_src>

<mosaic_0001>
module attributes {stable_mosaic.version = 11 : i64} {
  func.func @_dncm_kernel(%arg0: i32, %arg1: i32, %arg2: memref<1x3x256xf32, #tpu.memory_space<vmem>>, %arg3: memref<1x3x3xf32, #tpu.memory_space<vmem>>, %arg4: memref<1x3x256xf32, #tpu.memory_space<vmem>>) attributes {dimension_semantics = [#tpu.dimension_semantics<parallel>, #tpu.dimension_semantics<parallel>], iteration_bounds = array<i64: 2, 1>, scalar_prefetch = 0 : i64, scratch_operands = 0 : i64, tpu.core_type = #tpu.core_type<tc>, window_params = [{transform_indices = @transform_0, window_bounds = array<i64: 1, 3, 256>}, {transform_indices = @transform_1, window_bounds = array<i64: 1, 3, 3>}, {transform_indices = @transform_2, window_bounds = array<i64: 1, 3, 256>}]} {
    %c0 = arith.constant 0 : index
    %c0_0 = arith.constant 0 : index
    %c0_1 = arith.constant 0 : index
    %0 = vector.load %arg2[%c0, %c0_0, %c0_1] : memref<1x3x256xf32, #tpu.memory_space<vmem>>, vector<1x3x256xf32>
    %1 = vector.shape_cast %0 : vector<1x3x256xf32> to vector<3x256xf32>
    %c0_2 = arith.constant 0 : index
    %c0_3 = arith.constant 0 : index
    %c0_4 = arith.constant 0 : index
    %2 = vector.load %arg3[%c0_2, %c0_3, %c0_4] : memref<1x3x3xf32, #tpu.memory_space<vmem>>, vector<1x3x3xf32>
    %3 = vector.shape_cast %2 : vector<1x3x3xf32> to vector<3x3xf32>
    %4 = vector.extract_strided_slice %3 {offsets = [0, 0], sizes = [3, 1], strides = [1, 1]} : vector<3x3xf32> to vector<3x1xf32>
    %5 = vector.extract_strided_slice %1 {offsets = [0, 0], sizes = [1, 256], strides = [1, 1]} : vector<3x256xf32> to vector<1x256xf32>
    %6 = vector.broadcast %4 : vector<3x1xf32> to vector<3x256xf32>
    %7 = vector.broadcast %5 : vector<1x256xf32> to vector<3x256xf32>
    %8 = arith.mulf %6, %7 : vector<3x256xf32>
    %9 = vector.extract_strided_slice %3 {offsets = [0, 1], sizes = [3, 1], strides = [1, 1]} : vector<3x3xf32> to vector<3x1xf32>
    %10 = vector.extract_strided_slice %1 {offsets = [1, 0], sizes = [1, 256], strides = [1, 1]} : vector<3x256xf32> to vector<1x256xf32>
    %11 = vector.broadcast %9 : vector<3x1xf32> to vector<3x256xf32>
    %12 = vector.broadcast %10 : vector<1x256xf32> to vector<3x256xf32>
    %13 = arith.mulf %11, %12 : vector<3x256xf32>
    %14 = arith.addf %8, %13 : vector<3x256xf32>
    %15 = vector.extract_strided_slice %3 {offsets = [0, 2], sizes = [3, 1], strides = [1, 1]} : vector<3x3xf32> to vector<3x1xf32>
    %16 = vector.extract_strided_slice %1 {offsets = [2, 0], sizes = [1, 256], strides = [1, 1]} : vector<3x256xf32> to vector<1x256xf32>
    %17 = vector.broadcast %15 : vector<3x1xf32> to vector<3x256xf32>
    %18 = vector.broadcast %16 : vector<1x256xf32> to vector<3x256xf32>
    %19 = arith.mulf %17, %18 : vector<3x256xf32>
    %20 = arith.addf %14, %19 : vector<3x256xf32>
    %c0_5 = arith.constant 0 : index
    %c0_6 = arith.constant 0 : index
    %c0_7 = arith.constant 0 : index
    %21 = vector.load %arg4[%c0_5, %c0_6, %c0_7] : memref<1x3x256xf32, #tpu.memory_space<vmem>>, vector<1x3x256xf32>
    %22 = vector.shape_cast %21 : vector<1x3x256xf32> to vector<3x256xf32>
    %23 = vector.shape_cast %20 : vector<3x256xf32> to vector<1x3x256xf32>
    tpu.vector_store %arg4[%c0_5, %c0_6, %c0_7], %23 {strides = array<i32>} : memref<1x3x256xf32, #tpu.memory_space<vmem>>, vector<1x3x256xf32>,
    return
  }
  func.func @transform_0(%arg0: i32, %arg1: i32) -> (i32, i32, i32) {
    %c0_i32 = arith.constant 0 : i32
    %c0_i32_0 = arith.constant 0 : i32
    return %arg0, %c0_i32, %arg1 : i32, i32, i32
  }
  func.func @transform_1(%arg0: i32, %arg1: i32) -> (i32, i32, i32) {
    %c0_i32 = arith.constant 0 : i32
    %c0_i32_0 = arith.constant 0 : i32
    %c0_i32_1 = arith.constant 0 : i32
    return %arg0, %c0_i32, %c0_i32_0 : i32, i32, i32
  }
  func.func @transform_2(%arg0: i32, %arg1: i32) -> (i32, i32, i32) {
    %c0_i32 = arith.constant 0 : i32
    %c0_i32_0 = arith.constant 0 : i32
    return %arg0, %c0_i32, %arg1 : i32, i32, i32
  }
}

</mosaic_0001>

<llo_original>
// kernel: dncm_forward.1
$region0: #{dncm_forward.1}
  #allocation0 [shape = 'u32[]', space=smem, size = 0x4, offset = 0x4, fixed_abs, tag = 'smem constant byte address 0x4 - core index']
  #allocation1 [shape = 'u32[144,128]{1,0:T(1,128)}', space=vmem, size = 0x12000, scoped, tag = 'internal scratch']
  %s0 = inlined_call_operand.vmem [shape: f32[2,3,256], index: 0, kind: input, shape index: {}]
  %s1 = inlined_call_operand.vmem [shape: f32[2,3,3], index: 1, kind: input, shape index: {}]
  %s2 = inlined_call_operand.vmem [shape: f32[2,3,256], index: 2, kind: output, shape index: {}]
  %s3 = sld [smem:[#allocation0]]
  $region41: #{dncm_forward.1} parent=0
    _
  %s5 = ssub.s32 1, %s3
  %s6 = scalar_select 0, %s5, %s3
  loop: start=0, step=1, limit=4
  $region2: #{dncm_forward.1} parent=0 // loop_pre_header
    _
  $region3: #{dncm_forward.1} parent=0 // loop_header
    %s8 = sphi 0, %s12
    %p9 = scmp.ge.s32.totalorder %s8, 4
    %s15 = sphi 0, %s27
    %s16 = sphi 0, %s23
    %s17 = sphi 0, %s15
    %s18 = sphi 0, %s16
    %s19 = sphi 0, %s17
    %s20 = sphi 0, %s18
    %s32 = sphi 0, %s34
    %s35 = sphi 0, %s32
    %s36 = sphi 0, %s35
    %s52 = sphi 0, %s36
    %s58 = sphi 0, %s60
    %s61 = sphi 0, %s58
    %s62 = sphi 0, %s61
    %s78 = sphi 0, %s62
    %s86 = sphi 0, %s88
    %s89 = sphi 0, %s86
    %s90 = sphi 0, %s89
    %s106 = sphi 0, %s90
  $region4: #{dncm_forward.1} parent=0 // loop_header_branch
    %11 = sbr.rel (%p9) target = $region8
  $region5: #{dncm_forward.1} parent=0 // loop_body
    %s13 = ssub.s32 %s8, 1
    %s14 = ssub.s32 %s8, 2
    %s21 = sadd.s32 1, %s16
    %p22 = scmp.ge.s32.totalorder %s21, 1
    %s23 = scalar_select %p22, 0, %s21
    %s24 = sadd.s32 1, %s15
    %s25 = scalar_select %p22, %s24, %s15
    %p26 = scmp.ge.s32.totalorder %s25, 2
    %s27 = scalar_select %p26, 0, %s25
    %s28 = ssub.s32 %s15, %s27
    %s29 = ssub.s32 %s16, %s23
    %s30 = sor.u32 %s28, %s29
    %p31 = scmp.eq.s32.totalorder %s30, 0
    %s33 = sadd.s32 %s32, 1
    %s34 = scalar_select %p31, %s32, %s33
    %p37 = pneg %p31
    %p38 = scmp.eq.s32.totalorder %s8, 1
    %p39 = por %p37, %p38
    %p40 = scmp.ne.s32.totalorder %s32, %s35
    %p41 = scmp.eq.s32.totalorder %s8, 0
    %p42 = por %p40, %p41
    %p43 = scmp.ne.s32.totalorder %s32, %s35
    %p44 = scmp.eq.s32.totalorder %s13, 1
    %p45 = por %p43, %p44
    %p46 = scmp.ne.s32.totalorder %s35, %s36
    %p47 = scmp.eq.s32.totalorder %s13, 0
    %p48 = por %p46, %p47
    %p49 = scmp.ne.s32.totalorder %s35, %s36
    %p50 = scmp.eq.s32.totalorder %s14, 1
    %p51 = por %p49, %p50
    %p53 = scmp.ne.s32.totalorder %s36, %s52
    %p54 = scmp.eq.s32.totalorder %s14, 0
    %p55 = por %p53, %p54
    %s56 = ssub.s32 %s15, %s27
    %p57 = scmp.eq.s32.totalorder %s56, 0
    %s59 = sadd.s32 %s58, 1
    %s60 = scalar_select %p57, %s58, %s59
    %p63 = pneg %p57
    %p64 = scmp.eq.s32.totalorder %s8, 1
    %p65 = por %p63, %p64
    %p66 = scmp.ne.s32.totalorder %s58, %s61
    %p67 = scmp.eq.s32.totalorder %s8, 0
    %p68 = por %p66, %p67
    %p69 = scmp.ne.s32.totalorder %s58, %s61
    %p70 = scmp.eq.s32.totalorder %s13, 1
    %p71 = por %p69, %p70
    %p72 = scmp.ne.s32.totalorder %s61, %s62
    %p73 = scmp.eq.s32.totalorder %s13, 0
    %p74 = por %p72, %p73
    %p75 = scmp.ne.s32.totalorder %s61, %s62
    %p76 = scmp.eq.s32.totalorder %s14, 1
    %p77 = por %p75, %p76
    %p79 = scmp.ne.s32.totalorder %s62, %s78
    %p80 = scmp.eq.s32.totalorder %s14, 0
    %p81 = por %p79, %p80
    %s82 = ssub.s32 %s15, %s27
    %s83 = ssub.s32 %s16, %s23
    %s84 = sor.u32 %s82, %s83
    %p85 = scmp.eq.s32.totalorder %s84, 0
    %s87 = sadd.s32 %s86, 1
    %s88 = scalar_select %p85, %s86, %s87
    %p91 = pneg %p85
    %p92 = scmp.eq.s32.totalorder %s8, 1
    %p93 = por %p91, %p92
    %p94 = scmp.ne.s32.totalorder %s86, %s89
    %p95 = scmp.eq.s32.totalorder %s8, 0
    %p96 = por %p94, %p95
    %p97 = scmp.ne.s32.totalorder %s86, %s89
    %p98 = scmp.eq.s32.totalorder %s13, 1
    %p99 = por %p97, %p98
    %p100 = scmp.ne.s32.totalorder %s89, %s90
    %p101 = scmp.eq.s32.totalorder %s13, 0
    %p102 = por %p100, %p101
    %p103 = scmp.ne.s32.totalorder %s89, %s90
    %p104 = scmp.eq.s32.totalorder %s14, 1
    %p105 = por %p103, %p104
    %p107 = scmp.ne.s32.totalorder %s90, %s106
    %p108 = scmp.eq.s32.totalorder %s14, 0
    %p109 = por %p107, %p108
    %p110 = scmp.le.s32.totalorder 1, %s8
    %p111 = scmp.lt.s32.totalorder %s8, 3
    %p112 = pnand %p110, %p111
    %p113 = pneg %p112
    // Predicated region
    $region9: #{dncm_forward.1} parent=5 // pred_check
      _
    $region10: #{dncm_forward.1} parent=5 // pred_check_branch
      %115 = sbr.rel (%p112) target = $region12
    $region11: #{dncm_forward.1} parent=5 // pred_region
      %s116 = ssub.s32 %s8, 1
    $region12: #{dncm_forward.1} parent=5 // pred_fallthru
      _
    %p117 = scmp.lt.s32.totalorder %s8, 2
    // Predicated region
    $region13: #{dncm_forward.1} parent=5 // pred_check
      %p118 = pneg %p117
    $region14: #{dncm_forward.1} parent=5 // pred_check_branch
      %120 = sbr.rel (%p118) target = $region16
    $region15: #{dncm_forward.1} parent=5 // pred_region
      // Predicated region
      $region17: #{dncm_forward.1} parent=15 // pred_check
        %p121 = pneg %p42
      $region18: #{dncm_forward.1} parent=15 // pred_check_branch
        %123 = sbr.rel (%p121) target = $region20
      $region19: #{dncm_forward.1} parent=15 // pred_region
        %s124 = smul.u32 2, %s16
        %p125 = scmp.lt.s32.totalorder %s15, 1
        %s126 = scalar_select %p125, %s15, 1
        %p127 = scmp.lt.s32.totalorder %s124, 1
        %s128 = scalar_select %p127, %s124, 1
        %s129 = smul.addr %s126, 2
        %s130 = sadd.s32 %s128, %s129
        %s131 = smul.addr %s130, 4
        %s132 = scalar_lea.vmem %s0, %s131
        %s133 = smul.u32 2, %s16
      $region20: #{dncm_forward.1} parent=15 // pred_fallthru
        _
      // Predicated region
      $region21: #{dncm_forward.1} parent=15 // pred_check
        %p134 = pneg %p68
      $region22: #{dncm_forward.1} parent=15 // pred_check_branch
        %136 = sbr.rel (%p134) target = $region24
      $region23: #{dncm_forward.1} parent=15 // pred_region
        %p137 = scmp.lt.s32.totalorder %s15, 1
        %s138 = scalar_select %p137, %s15, 1
        %s139 = smul.addr %s138, 4
        %s140 = scalar_lea.vmem %s1, %s139
      $region24: #{dncm_forward.1} parent=15 // pred_fallthru
        _
    $region16: #{dncm_forward.1} parent=5 // pred_fallthru
      _
    %p141 = scmp.le.s32.totalorder 1, %s8
    %p142 = scmp.lt.s32.totalorder %s8, 3
    %p143 = pnand %p141, %p142
    %p144 = pneg %p143
    // Predicated region
    $region25: #{dncm_forward.1} parent=5 // pred_check
      _
    $region26: #{dncm_forward.1} parent=5 // pred_check_branch
      %146 = sbr.rel (%p143) target = $region28
    $region27: #{dncm_forward.1} parent=5 // pred_region
      %s147 = ssub.s32 %s8, 1
      %s148 = smul.u32 2, %s18
      %p149 = scmp.lt.s32.totalorder %s17, 1
      %s150 = scalar_select %p149, %s17, 1
      %p151 = scmp.lt.s32.totalorder %s148, 1
      %s152 = scalar_select %p151, %s148, 1
      %s153 = smul.addr %s150, 2
      %s154 = sadd.s32 %s152, %s153
      %s155 = smul.addr %s154, 4
      %s156 = scalar_lea.vmem %s0, %s155
      %p157 = pneg %p48
      %p158 = pneg %p45
      %p159 = scmp.lt.s32.totalorder %s17, 1
      %s160 = scalar_select %p159, %s17, 1
      %s161 = smul.addr %s160, 4
      %s162 = scalar_lea.vmem %s1, %s161
      %p163 = pneg %p74
      %p164 = pneg %p71
      %p165 = pneg %p102
      %p166 = pneg %p99
      %s167 = smul.u32 2, %s18
      %p168 = scmp.lt.s32.totalorder %s17, 1
      %s169 = scalar_select %p168, %s17, 1
      %p170 = scmp.lt.s32.totalorder %s167, 1
      %s171 = scalar_select %p170, %s167, 1
      %s172 = smul.addr %s169, 2
      %s173 = sadd.s32 %s171, %s172
      %s174 = smul.addr %s173, 4
      %s175 = scalar_lea.vmem %s2, %s174
      %s176 = smul.u32 2, %s18
      %p177 = scmp.lt.s32.totalorder %s17, 1
      %s178 = scalar_select %p177, %s17, 1
      %p179 = scmp.lt.s32.totalorder %s176, 1
      %s180 = scalar_select %p179, %s176, 1
      %s181 = smul.addr %s178, 2
      %s182 = sadd.s32 %s180, %s181
      %s183 = smul.addr %s182, 4
      %s184 = scalar_lea.vmem %s0, %s183
      %s185 = smul.u32 2, %s18
      %p186 = scmp.lt.s32.totalorder %s17, 1
      %s187 = scalar_select %p186, %s17, 1
      %s188 = smul.addr %s187, 4
      %s189 = scalar_lea.vmem %s1, %s188
      %s190 = smul.u32 2, %s18
      %p191 = scmp.lt.s32.totalorder %s17, 1
      %s192 = scalar_select %p191, %s17, 1
      %p193 = scmp.lt.s32.totalorder %s190, 1
      %s194 = scalar_select %p193, %s190, 1
      %s195 = smul.addr %s192, 2
      %s196 = sadd.s32 %s194, %s195
      %s197 = smul.addr %s196, 4
      %s198 = scalar_lea.vmem %s2, %s197
      %s199 = smul.u32 2, %s18
      %v200 = vld [vmem:[%s184] sm:$0x77]
      %v201 = vld [vmem:[%s189] sm:$0x7]
      %203 = vset.pattern.permute.xlu0 0
      %204 = vperm.xlu0 %203, %v201
      %v205 = vpop.permute.xlu0 %204
      %v208 = vlaneseq
      %v209 = vshrl.u32 %v208, 7
      %v210 = vsub.s32 0, %v209
      %v211 = vrot.slane %v200, %v210
      %v212 = vlaneseq
      %v213 = vshrl.u32 %v212, 7
      %v214 = vsub.s32 4, %v213
      %v215 = vrot.slane %v200, %v214
      %v218 = vlaneseq
      %v219 = vshrl.u32 %v218, 7
      %v220 = vsub.s32 0, %v219
      %v221 = vrot.slane %v211, %v220
      %v222 = vlaneseq
      %v223 = vshrl.u32 %v222, 7
      %v224 = vsub.s32 0, %v223
      %v225 = vrot.slane %v215, %v224
      %v226 = vmul.f32 %v205, %v221
      %v227 = vmul.f32 %v205, %v225
      %228 = vset.pattern.permute.xlu0 1
      %229 = vperm.xlu0 %228, %v201
      %v230 = vpop.permute.xlu0 %229
      %v232 = vlaneseq
      %v233 = vshrl.u32 %v232, 7
      %v234 = vsub.s32 1, %v233
      %v235 = vrot.slane %v200, %v234
      %v236 = vlaneseq
      %v237 = vshrl.u32 %v236, 7
      %v238 = vsub.s32 5, %v237
      %v239 = vrot.slane %v200, %v238
      %v242 = vlaneseq
      %v243 = vshrl.u32 %v242, 7
      %v244 = vsub.s32 1, %v243
      %v245 = vrot.slane %v235, %v244
      %v246 = vlaneseq
      %v247 = vshrl.u32 %v246, 7
      %v248 = vsub.s32 1, %v247
      %v249 = vrot.slane %v239, %v248
      %v250 = vmul.f32 %v230, %v245
      %v251 = vmul.f32 %v230, %v249
      %v252 = vadd.f32 %v226, %v250
      %v253 = vadd.f32 %v227, %v251
      %254 = vset.pattern.permute.xlu0 2
      %255 = vperm.xlu0 %254, %v201
      %v256 = vpop.permute.xlu0 %255
      %v258 = vlaneseq
      %v259 = vshrl.u32 %v258, 7
      %v260 = vsub.s32 2, %v259
      %v261 = vrot.slane %v200, %v260
      %v262 = vlaneseq
      %v263 = vshrl.u32 %v262, 7
      %v264 = vsub.s32 6, %v263
      %v265 = vrot.slane %v200, %v264
      %v268 = vlaneseq
      %v269 = vshrl.u32 %v268, 7
      %v270 = vsub.s32 2, %v269
      %v271 = vrot.slane %v261, %v270
      %v272 = vlaneseq
      %v273 = vshrl.u32 %v272, 7
      %v274 = vsub.s32 2, %v273
      %v275 = vrot.slane %v265, %v274
      %v276 = vmul.f32 %v256, %v271
      %v277 = vmul.f32 %v256, %v275
      %v278 = vadd.f32 %v252, %v276
      %v279 = vadd.f32 %v253, %v277
      %v282 = vcombine.low %v278, %v279
      %284 = vst [vmem:[%s198] sm:$0x77] %v282
      %s285 = smul.u32 2, %s18
      %p286 = scmp.lt.s32.totalorder %s17, 1
      %s287 = scalar_select %p286, %s17, 1
      %p288 = scmp.lt.s32.totalorder %s285, 1
      %s289 = scalar_select %p288, %s285, 1
      %s290 = smul.addr %s287, 2
      %s291 = sadd.s32 %s289, %s290
      %s292 = smul.addr %s291, 4
      %s293 = scalar_lea.vmem %s2, %s292
      // Predicated region
      $region29: #{dncm_forward.1} parent=27 // pred_check
        %p294 = pneg %p99
      $region30: #{dncm_forward.1} parent=27 // pred_check_branch
        %296 = sbr.rel (%p294) target = $region32
      $region31: #{dncm_forward.1} parent=27 // pred_region
        %s297 = smul.u32 2, %s18
      $region32: #{dncm_forward.1} parent=27 // pred_fallthru
        _
    $region28: #{dncm_forward.1} parent=5 // pred_fallthru
      _
    %p298 = scmp.le.s32.totalorder 2, %s8
    // Predicated region
    $region33: #{dncm_forward.1} parent=5 // pred_check
      %p299 = pneg %p298
    $region34: #{dncm_forward.1} parent=5 // pred_check_branch
      %301 = sbr.rel (%p299) target = $region36
    $region35: #{dncm_forward.1} parent=5 // pred_region
      %s302 = ssub.s32 %s8, 2
      // Predicated region
      $region37: #{dncm_forward.1} parent=35 // pred_check
        %p303 = pneg %p105
      $region38: #{dncm_forward.1} parent=35 // pred_check_branch
        %305 = sbr.rel (%p303) target = $region40
      $region39: #{dncm_forward.1} parent=35 // pred_region
        %s306 = smul.u32 2, %s20
        %p307 = scmp.lt.s32.totalorder %s19, 1
        %s308 = scalar_select %p307, %s19, 1
        %p309 = scmp.lt.s32.totalorder %s306, 1
        %s310 = scalar_select %p309, %s306, 1
        %s311 = smul.addr %s308, 2
        %s312 = sadd.s32 %s310, %s311
        %s313 = smul.addr %s312, 4
        %s314 = scalar_lea.vmem %s2, %s313
      $region40: #{dncm_forward.1} parent=35 // pred_fallthru
        _
    $region36: #{dncm_forward.1} parent=5 // pred_fallthru
      _
  $region6: #{dncm_forward.1} parent=0 // loop_footer
    %s12 = sadd.s32 1, %s8
  $region7: #{dncm_forward.1} parent=0 // loop_footer_branch
    %7 = sbr.rel target = $region3
  $region8: #{dncm_forward.1} parent=0 // loop_exit
    _

</llo_original>
